<compile_context>
chip_gen: v5e
topology: v5e:2x2
jax: 0.10.0
libtpu: 0.0.40
codegen_flags: <defaults>
</compile_context>

<pallas_src>
import math

import jax
import jax.numpy as jnp
from jax.experimental import pallas as pl
from jax.experimental.pallas import tpu as pltpu

_LANE = 128
_NEG_BIG = -1e30  # finite "minus infinity" for padded softmax lanes (no NaNs)


def _round_up(x, m):
    return ((x + m - 1) // m) * m


def _cdiv(a, b):
    return (a + b - 1) // b


def _mlp_kernel(x_ref, w1_ref, b1_ref, w2_ref, b2_ref, w3_ref, b3_ref,
                o_ref, acc_ref):
    k = pl.program_id(1)

    @pl.when(k == 0)
    def _():
        acc_ref[...] = jnp.zeros_like(acc_ref)

    # layer1 partial matmul: f32 x tile cast to bf16 in-register, f32 accumulate.
    acc_ref[...] += jnp.dot(x_ref[...].astype(jnp.bfloat16), w1_ref[...],
                            preferred_element_type=jnp.float32)

    @pl.when(k == pl.num_programs(1) - 1)
    def _():
        # layer1 bias + ReLU (padded lanes: ReLU(0 + 0) = 0, so no contribution)
        h1 = jnp.maximum(acc_ref[...] + b1_ref[...], 0.0)
        # layer2: Linear + ReLU
        h2 = jnp.dot(h1.astype(jnp.bfloat16), w2_ref[...],
                     preferred_element_type=jnp.float32)
        h2 = jnp.maximum(h2 + b2_ref[...], 0.0)
        # out: Linear + Softmax(dim=-1); padded logits carry a -1e30 bias.
        logits = jnp.dot(h2.astype(jnp.bfloat16), w3_ref[...],
                         preferred_element_type=jnp.float32)
        logits = logits + b3_ref[...]
        m = jnp.max(logits, axis=-1, keepdims=True)
        e = jnp.exp(logits - m)                 # pad lanes -> exp(-huge) = 0
        denom = jnp.sum(e, axis=-1, keepdims=True)
        o_ref[...] = e * pl.reciprocal(denom, approx=True)   # EUP slot


def net_forward(x_nchw, params, tile_m_max=512, tile_k_max=2048):
    """Flatten NCHW input and run the fused 3-layer MLP on TPU."""
    w1, b1, w2, b2, w3, b3 = params
    n = x_nchw.shape[0]
    x2d = x_nchw.reshape(n, -1)                 # keep f32; bf16 cast is in-kernel
    in_dim = x2d.shape[1]
    l1, l2, out_dim = w1.shape[1], w2.shape[1], w3.shape[1]

    # ---- lane-dense padded layer widths (multiples of 128) -------------------
    l1p = _round_up(l1, _LANE)
    l2p = _round_up(l2, _LANE)
    outp = _round_up(out_dim, _LANE)

    # ---- K (in_dim) tiling for layer 1 --------------------------------------
    if in_dim <= tile_k_max:
        tile_k, in_dim_p = in_dim, in_dim       # single K step, full row resident
    else:
        tile_k = tile_k_max                     # multiple of 128
        in_dim_p = _round_up(in_dim, tile_k)
    grid_k = in_dim_p // tile_k

    # ---- batch (M) tiling: bound padding waste, give v7x's 2 TCs work --------
    n16 = _round_up(n, 16)                      # 16-row alignment (bf16 packing)
    num_m = max(1, _cdiv(n16, tile_m_max))
    tile_m = _round_up(_cdiv(n16, num_m), 16)   # padding waste < one tile
    if n16 > 16:
        tile_m = min(tile_m, _round_up(_cdiv(n16, 2), 16))   # >= 2 grid steps

    # ---- generation-aware VMEM budget ----------------------------------------
    def vmem_need(tm):
        w1_bytes = (1 if grid_k == 1 else 2) * tile_k * l1p * 2     # bf16
        w_rest = (l1p * l2p + l2p * outp) * 2 + (l1p + l2p + outp) * 4
        x_bytes = 2 * tm * tile_k * x2d.dtype.itemsize              # double-buffered
        o_bytes = 2 * tm * outp * 4                                  # double-buffered
        acc_bytes = tm * l1p * 4
        live = 3 * tm * max(l1p, l2p, outp) * 4                      # h1/h2/logits
        return w1_bytes + w_rest + x_bytes + o_bytes + acc_bytes + live

    try:
        vmem_cap = int(pltpu.get_tpu_info().vmem_capacity_bytes)
    except Exception:
        vmem_cap = 64 << 20                     # v7x-safe fallback
    budget = (vmem_cap * 3) // 4
    while tile_m > 16 and vmem_need(tile_m) > budget:
        tile_m = _round_up(tile_m // 2, 16)
    vmem_limit = int(min(max(vmem_need(tile_m) + (8 << 20), 32 << 20), vmem_cap))

    n_pad = _round_up(n, tile_m)
    grid_m = n_pad // tile_m

    # ---- pad input / params (zero pads; b3 pad is -1e30 for softmax) ---------
    pad_rows, pad_cols = n_pad - n, in_dim_p - in_dim
    if pad_rows or pad_cols:
        x2d = jnp.pad(x2d, ((0, pad_rows), (0, pad_cols)))

    w1b = jnp.pad(w1, ((0, in_dim_p - in_dim), (0, l1p - l1))).astype(jnp.bfloat16)
    b1p = jnp.pad(b1, ((0, 0), (0, l1p - l1)))
    w2b = jnp.pad(w2, ((0, l1p - l1), (0, l2p - l2))).astype(jnp.bfloat16)
    b2p = jnp.pad(b2, ((0, 0), (0, l2p - l2)))
    w3b = jnp.pad(w3, ((0, l2p - l2), (0, outp - out_dim))).astype(jnp.bfloat16)
    b3p = jnp.pad(b3, ((0, 0), (0, outp - out_dim)), constant_values=_NEG_BIG)

    flops = 2 * n_pad * (in_dim_p * l1p + l1p * l2p + l2p * outp)
    transcendentals = n_pad * (outp + 1)        # exp + reciprocal
    bytes_accessed = (x2d.size * x2d.dtype.itemsize
                      + (w1b.size + w2b.size + w3b.size) * 2
                      + (b1p.size + b2p.size + b3p.size) * 4
                      + n_pad * outp * 4)

    resident = pl.Buffered(1)                   # grid-invariant: single-buffer
    w1_kwargs = {"pipeline_mode": resident} if grid_k == 1 else {}

    out = pl.pallas_call(
        _mlp_kernel,
        out_shape=jax.ShapeDtypeStruct((n_pad, outp), jnp.float32),
        grid=(grid_m, grid_k),
        in_specs=[
            pl.BlockSpec((tile_m, tile_k), lambda i, k: (i, k)),          # x tile
            pl.BlockSpec((tile_k, l1p), lambda i, k: (k, 0), **w1_kwargs),  # w1
            pl.BlockSpec((1, l1p), lambda i, k: (0, 0), pipeline_mode=resident),
            pl.BlockSpec((l1p, l2p), lambda i, k: (0, 0), pipeline_mode=resident),
            pl.BlockSpec((1, l2p), lambda i, k: (0, 0), pipeline_mode=resident),
            pl.BlockSpec((l2p, outp), lambda i, k: (0, 0), pipeline_mode=resident),
            pl.BlockSpec((1, outp), lambda i, k: (0, 0), pipeline_mode=resident),
        ],
        out_specs=pl.BlockSpec((tile_m, outp), lambda i, k: (i, 0)),
        scratch_shapes=[pltpu.VMEM((tile_m, l1p), jnp.float32)],
        compiler_params=pltpu.CompilerParams(
            dimension_semantics=("parallel", "arbitrary"),
            vmem_limit_bytes=vmem_limit),
        cost_estimate=pl.CostEstimate(flops=flops,
                                      transcendentals=transcendentals,
                                      bytes_accessed=bytes_accessed),
    )(x2d, w1b, b1p, w2b, b2p, w3b, b3p)
    return out[:n, :out_dim]


def init_params(key, input_dim, layer1_dim, layer2_dim, output_dim):
    """Deterministic init mimicking nn.Linear (uniform +/- 1/sqrt(fan_in)).

    Weights stored as (in, out) so the kernel computes x @ W + b, which equals
    PyTorch's x @ W_pt.T + b.
    """
    dims = [(input_dim, layer1_dim), (layer1_dim, layer2_dim),
            (layer2_dim, output_dim)]
    params = []
    for (fan_in, fan_out) in dims:
        key, kw, kb = jax.random.split(key, 3)
        bound = 1.0 / math.sqrt(fan_in)
        w = jax.random.uniform(kw, (fan_in, fan_out), jnp.float32, -bound, bound)
        b = jax.random.uniform(kb, (1, fan_out), jnp.float32, -bound, bound)
        params += [w, b]
    return tuple(params)


def _reference(x_nchw, params):
    w1, b1, w2, b2, w3, b3 = params
    x = x_nchw.reshape(x_nchw.shape[0], -1).astype(jnp.float32)
    h1 = jnp.maximum(x @ w1 + b1, 0.0)
    h2 = jnp.maximum(h1 @ w2 + b2, 0.0)
    return jax.nn.softmax(h2 @ w3 + b3, axis=-1)


if __name__ == "__main__":
    # Small shapes: batch=8, C=4, H=W=8 -> input_dim=256
    batch, C, H, W = 8, 4, 8, 8
    input_dim = C * H * W          # 256
    layer1_dim, layer2_dim, output_dim = 128, 64, 16

    key = jax.random.PRNGKey(0)
    key, kx = jax.random.split(key)
    x = jax.random.normal(kx, (batch, C, H, W), jnp.float32)
    params = init_params(key, input_dim, layer1_dim, layer2_dim, output_dim)

    out = net_forward(x, params)
    out = jax.block_until_ready(out)

    ref = _reference(x, params)
    assert out.shape == (batch, output_dim)
    # bf16 matmul operands + approx reciprocal => looser tolerance vs f32 ref.
    assert jnp.allclose(out, ref, atol=3e-2, rtol=3e-2)
    assert jnp.allclose(jnp.sum(out, axis=-1), 1.0, atol=1e-2)

    print("KERNEL_OK")
</pallas_src>

<mosaic_0001>
module attributes {stable_mosaic.version = 11 : i64} {
  func.func @_mlp_kernel(%arg0: i32, %arg1: i32, %arg2: memref<16x256xf32, #tpu.memory_space<vmem>>, %arg3: memref<256x128xbf16, #tpu.memory_space<vmem>>, %arg4: memref<1x128xf32, #tpu.memory_space<vmem>>, %arg5: memref<128x128xbf16, #tpu.memory_space<vmem>>, %arg6: memref<1x128xf32, #tpu.memory_space<vmem>>, %arg7: memref<128x128xbf16, #tpu.memory_space<vmem>>, %arg8: memref<1x128xf32, #tpu.memory_space<vmem>>, %arg9: memref<16x128xf32, #tpu.memory_space<vmem>>, %arg10: memref<16x128xf32, #tpu.memory_space<vmem>>) attributes {dimension_semantics = [#tpu.dimension_semantics<parallel>, #tpu.dimension_semantics<arbitrary>], iteration_bounds = array<i64: 1, 1>, scalar_prefetch = 0 : i64, scratch_operands = 1 : i64, tpu.core_type = #tpu.core_type<tc>, window_params = [{transform_indices = @transform_0, window_bounds = array<i64: 16, 256>}, {pipeline_mode = #tpu.pipeline_mode<synchronous>, transform_indices = @transform_1, window_bounds = array<i64: 256, 128>}, {pipeline_mode = #tpu.pipeline_mode<synchronous>, transform_indices = @transform_2, window_bounds = array<i64: 1, 128>}, {pipeline_mode = #tpu.pipeline_mode<synchronous>, transform_indices = @transform_3, window_bounds = array<i64: 128, 128>}, {pipeline_mode = #tpu.pipeline_mode<synchronous>, transform_indices = @transform_4, window_bounds = array<i64: 1, 128>}, {pipeline_mode = #tpu.pipeline_mode<synchronous>, transform_indices = @transform_5, window_bounds = array<i64: 128, 128>}, {pipeline_mode = #tpu.pipeline_mode<synchronous>, transform_indices = @transform_6, window_bounds = array<i64: 1, 128>}, {transform_indices = @transform_7, window_bounds = array<i64: 16, 128>}]} {
    %c0_i32 = arith.constant 0 : i32
    %0 = arith.cmpi eq, %arg1, %c0_i32 : i32
    %1 = arith.extui %0 : i1 to i32
    %c0_i32_0 = arith.constant 0 : i32
    %2 = arith.cmpi ne, %1, %c0_i32_0 : i32
    scf.if %2 {
      %cst_10 = arith.constant 0.000000e+00 : f32
      %13 = vector.broadcast %cst_10 : f32 to vector<16x128xf32>
      %c0_11 = arith.constant 0 : index
      %c0_12 = arith.constant 0 : index
      %14 = vector.load %arg10[%c0_11, %c0_12] : memref<16x128xf32, #tpu.memory_space<vmem>>, vector<16x128xf32>
      tpu.vector_store %arg10[%c0_11, %c0_12], %13 {strides = array<i32>} : memref<16x128xf32, #tpu.memory_space<vmem>>, vector<16x128xf32>,
    } else {
    }
    %c0 = arith.constant 0 : index
    %c0_1 = arith.constant 0 : index
    %3 = vector.load %arg10[%c0, %c0_1] : memref<16x128xf32, #tpu.memory_space<vmem>>, vector<16x128xf32>
    %c0_2 = arith.constant 0 : index
    %c0_3 = arith.constant 0 : index
    %4 = vector.load %arg2[%c0_2, %c0_3] : memref<16x256xf32, #tpu.memory_space<vmem>>, vector<16x256xf32>
    %5 = arith.truncf %4 : vector<16x256xf32> to vector<16x256xbf16>
    %c0_4 = arith.constant 0 : index
    %c0_5 = arith.constant 0 : index
    %6 = vector.load %arg3[%c0_4, %c0_5] : memref<256x128xbf16, #tpu.memory_space<vmem>>, vector<256x128xbf16>
    %cst = arith.constant dense<0.000000e+00> : vector<16x128xf32>
    %7 = tpu.matmul %5, %6, %cst {dimension_numbers = #tpu.dot_dimension_numbers<[1], [0], [0], [1], [0, 0, 1, 1], [], []>} : vector<16x256xbf16>, vector<256x128xbf16>, vector<16x128xf32> -> vector<16x128xf32>
    %8 = arith.addf %3, %7 : vector<16x128xf32>
    %c0_6 = arith.constant 0 : index
    %c0_7 = arith.constant 0 : index
    %9 = vector.load %arg10[%c0_6, %c0_7] : memref<16x128xf32, #tpu.memory_space<vmem>>, vector<16x128xf32>
    tpu.vector_store %arg10[%c0_6, %c0_7], %8 {strides = array<i32>} : memref<16x128xf32, #tpu.memory_space<vmem>>, vector<16x128xf32>,
    %c0_i32_8 = arith.constant 0 : i32
    %10 = arith.cmpi eq, %arg1, %c0_i32_8 : i32
    %11 = arith.extui %10 : i1 to i32
    %c0_i32_9 = arith.constant 0 : i32
    %12 = arith.cmpi ne, %11, %c0_i32_9 : i32
    scf.if %12 {
      %c0_10 = arith.constant 0 : index
      %c0_11 = arith.constant 0 : index
      %13 = vector.load %arg10[%c0_10, %c0_11] : memref<16x128xf32, #tpu.memory_space<vmem>>, vector<16x128xf32>
      %c0_12 = arith.constant 0 : index
      %c0_13 = arith.constant 0 : index
      %14 = vector.load %arg4[%c0_12, %c0_13] : memref<1x128xf32, #tpu.memory_space<vmem>>, vector<1x128xf32>
      %15 = vector.broadcast %14 : vector<1x128xf32> to vector<16x128xf32>
      %16 = arith.addf %13, %15 : vector<16x128xf32>
      %cst_14 = arith.constant 0.000000e+00 : f32
      %17 = vector.broadcast %cst_14 : f32 to vector<16x128xf32>
      %18 = arith.maximumf %16, %17 : vector<16x128xf32>
      %19 = arith.truncf %18 : vector<16x128xf32> to vector<16x128xbf16>
      %c0_15 = arith.constant 0 : index
      %c0_16 = arith.constant 0 : index
      %20 = vector.load %arg5[%c0_15, %c0_16] : memref<128x128xbf16, #tpu.memory_space<vmem>>, vector<128x128xbf16>
      %cst_17 = arith.constant dense<0.000000e+00> : vector<16x128xf32>
      %21 = tpu.matmul %19, %20, %cst_17 {dimension_numbers = #tpu.dot_dimension_numbers<[1], [0], [0], [1], [0, 0, 1, 1], [], []>} : vector<16x128xbf16>, vector<128x128xbf16>, vector<16x128xf32> -> vector<16x128xf32>
      %c0_18 = arith.constant 0 : index
      %c0_19 = arith.constant 0 : index
      %22 = vector.load %arg6[%c0_18, %c0_19] : memref<1x128xf32, #tpu.memory_space<vmem>>, vector<1x128xf32>
      %23 = vector.broadcast %22 : vector<1x128xf32> to vector<16x128xf32>
      %24 = arith.addf %21, %23 : vector<16x128xf32>
      %cst_20 = arith.constant 0.000000e+00 : f32
      %25 = vector.broadcast %cst_20 : f32 to vector<16x128xf32>
      %26 = arith.maximumf %24, %25 : vector<16x128xf32>
      %27 = arith.truncf %26 : vector<16x128xf32> to vector<16x128xbf16>
      %c0_21 = arith.constant 0 : index
      %c0_22 = arith.constant 0 : index
      %28 = vector.load %arg7[%c0_21, %c0_22] : memref<128x128xbf16, #tpu.memory_space<vmem>>, vector<128x128xbf16>
      %cst_23 = arith.constant dense<0.000000e+00> : vector<16x128xf32>
      %29 = tpu.matmul %27, %28, %cst_23 {dimension_numbers = #tpu.dot_dimension_numbers<[1], [0], [0], [1], [0, 0, 1, 1], [], []>} : vector<16x128xbf16>, vector<128x128xbf16>, vector<16x128xf32> -> vector<16x128xf32>
      %c0_24 = arith.constant 0 : index
      %c0_25 = arith.constant 0 : index
      %30 = vector.load %arg8[%c0_24, %c0_25] : memref<1x128xf32, #tpu.memory_space<vmem>>, vector<1x128xf32>
      %31 = vector.broadcast %30 : vector<1x128xf32> to vector<16x128xf32>
      %32 = arith.addf %29, %31 : vector<16x128xf32>
      %cst_26 = arith.constant dense<0xFF800000> : vector<16xf32>
      %33 = vector.multi_reduction <maximumf>, %32, %cst_26 [1] : vector<16x128xf32> to vector<16xf32>
      %34 = vector.shape_cast %33 : vector<16xf32> to vector<16x1xf32>
      %35 = vector.broadcast %34 : vector<16x1xf32> to vector<16x128xf32>
      %36 = arith.subf %32, %35 : vector<16x128xf32>
      %37 = math.exp %36 : vector<16x128xf32>
      %cst_27 = arith.constant dense<0.000000e+00> : vector<16xf32>
      %38 = vector.multi_reduction <add>, %37, %cst_27 [1] : vector<16x128xf32> to vector<16xf32>
      %39 = vector.shape_cast %38 : vector<16xf32> to vector<16x1xf32>
      %40 = tpu.reciprocal %39 {approx = true} : vector<16x1xf32> -> vector<16x1xf32>
      %41 = vector.broadcast %40 : vector<16x1xf32> to vector<16x128xf32>
      %42 = arith.mulf %37, %41 : vector<16x128xf32>
      %c0_28 = arith.constant 0 : index
      %c0_29 = arith.constant 0 : index
      %43 = vector.load %arg9[%c0_28, %c0_29] : memref<16x128xf32, #tpu.memory_space<vmem>>, vector<16x128xf32>
      tpu.vector_store %arg9[%c0_28, %c0_29], %42 {strides = array<i32>} : memref<16x128xf32, #tpu.memory_space<vmem>>, vector<16x128xf32>,
    } else {
    }
    return
  }
  func.func @transform_0(%arg0: i32, %arg1: i32) -> (i32, i32) {
    %c0_i32 = arith.constant 0 : i32
    return %arg0, %arg1 : i32, i32
  }
  func.func @transform_1(%arg0: i32, %arg1: i32) -> (i32, i32) {
    %c0_i32 = arith.constant 0 : i32
    %c0_i32_0 = arith.constant 0 : i32
    return %arg1, %c0_i32 : i32, i32
  }
  func.func @transform_2(%arg0: i32, %arg1: i32) -> (i32, i32) {
    %c0_i32 = arith.constant 0 : i32
    %c0_i32_0 = arith.constant 0 : i32
    %c0_i32_1 = arith.constant 0 : i32
    return %c0_i32, %c0_i32_0 : i32, i32
  }
  func.func @transform_3(%arg0: i32, %arg1: i32) -> (i32, i32) {
    %c0_i32 = arith.constant 0 : i32
    %c0_i32_0 = arith.constant 0 : i32
    %c0_i32_1 = arith.constant 0 : i32
    return %c0_i32, %c0_i32_0 : i32, i32
  }
  func.func @transform_4(%arg0: i32, %arg1: i32) -> (i32, i32) {
    %c0_i32 = arith.constant 0 : i32
    %c0_i32_0 = arith.constant 0 : i32
    %c0_i32_1 = arith.constant 0 : i32
    return %c0_i32, %c0_i32_0 : i32, i32
  }
  func.func @transform_5(%arg0: i32, %arg1: i32) -> (i32, i32) {
    %c0_i32 = arith.constant 0 : i32
    %c0_i32_0 = arith.constant 0 : i32
    %c0_i32_1 = arith.constant 0 : i32
    return %c0_i32, %c0_i32_0 : i32, i32
  }
  func.func @transform_6(%arg0: i32, %arg1: i32) -> (i32, i32) {
    %c0_i32 = arith.constant 0 : i32
    %c0_i32_0 = arith.constant 0 : i32
    %c0_i32_1 = arith.constant 0 : i32
    return %c0_i32, %c0_i32_0 : i32, i32
  }
  func.func @transform_7(%arg0: i32, %arg1: i32) -> (i32, i32) {
    %c0_i32 = arith.constant 0 : i32
    %c0_i32_0 = arith.constant 0 : i32
    return %arg0, %c0_i32 : i32, i32
  }
}

</mosaic_0001>

<llo_original>
// kernel: tpu_custom_call.1
$region0: #{tpu_custom_call.1}
  #allocation0 [shape = 'u32[]', space=smem, size = 0x4, offset = 0x4, fixed_abs, tag = 'smem constant byte address 0x4 - core index']
  #allocation1 [shape = 'u32[72,128]{1,0:T(1,128)}', space=vmem, size = 0x9000, scoped, tag = 'internal scratch']
  #allocation2 [shape = 'f32[16,128]{1,0:T(8,128)}', space=vmem, size = 0x2000, scoped, tag = 'scratch operand']
  %s0 = inlined_call_operand.hbm [shape: f32[16,256], index: 0, kind: input, shape index: {}]
  %s1 = inlined_call_operand.hbm [shape: bf16[256,128], index: 1, kind: input, shape index: {}]
  %s2 = inlined_call_operand.vmem [shape: f32[1,128], index: 2, kind: input, shape index: {}]
  %s3 = inlined_call_operand.hbm [shape: bf16[128,128], index: 3, kind: input, shape index: {}]
  %s4 = inlined_call_operand.vmem [shape: f32[1,128], index: 4, kind: input, shape index: {}]
  %s5 = inlined_call_operand.hbm [shape: bf16[128,128], index: 5, kind: input, shape index: {}]
  %s6 = inlined_call_operand.vmem [shape: f32[1,128], index: 6, kind: input, shape index: {}]
  %s7 = inlined_call_operand.hbm [shape: f32[16,128], index: 7, kind: output, shape index: {}]
  %s8 = sld [smem:[#allocation0]]
  $region62: #{tpu_custom_call.1} parent=0
    _
  %s10 = ssub.s32 1, %s8
  %s11 = scalar_select 0, %s10, %s8
  $region1: #{tpu_custom_call.1} parent=0
    #allocation3 [shape = 'u8[16384]{0}', space=vmem, size = 0x4000, scoped, tag = 'input window, operand 0, single buffered']
    #allocation4 [shape = 's32[1]{0}', space=sflag, size = 0x4, scoped, tag = 'scoped memory for tpu_custom_call.1']
    #allocation5 [shape = 's32[1]{0}', space=sflag, size = 0x4, scoped, tag = 'scoped memory for tpu_custom_call.1']
    #allocation6 [shape = 'u8[65536]{0}', space=vmem, size = 0x10000, scoped, tag = 'input window, operand 1, single buffered']
    #allocation7 [shape = 's32[1]{0}', space=sflag, size = 0x4, scoped, tag = 'scoped memory for tpu_custom_call.1']
    #allocation8 [shape = 'u8[32768]{0}', space=vmem, size = 0x8000, scoped, tag = 'input window, operand 3, single buffered']
    #allocation9 [shape = 'u8[32768]{0}', space=vmem, size = 0x8000, scoped, tag = 'input window, operand 5, single buffered']
    #allocation10 [shape = 's32[1]{0}', space=sflag, size = 0x4, scoped, tag = 'scoped memory for tpu_custom_call.1']
    #allocation11 [shape = 'u8[8192]{0}', space=vmem, size = 0x2000, scoped, tag = 'output window, operand 0, single buffered']
    %12 = vsyncpa [#allocation4], 0
    %13 = vsyncpa [#allocation7], 0
    %14 = vsyncpa [#allocation10], 0
    %15 = vsyncpa [#allocation5], 0
    // Predicated region
    $region2: #{tpu_custom_call.1} parent=1 // pred_check
      _
    $region3: #{tpu_custom_call.1} parent=1 // pred_check_branch
      %17 = sbr.rel (0) target = $region5
    $region4: #{tpu_custom_call.1} parent=1 // pred_region
      %19 = vsyncadd [#allocation4], 0
      %s20 = sshll.u32 %s0, 4
      %s21 = int_to_ptr.hbm [resolvable:$true] %s20
      %s22 = sshll.u32 [#allocation3], 4
      %s23 = int_to_ptr.vmem [resolvable:$true] %s22
      %28 = dma.hbm_to_vmem [thread:$0]  %s21, 512, %s23, [#allocation4], 256, 256, 16
    $region5: #{tpu_custom_call.1} parent=1 // pred_fallthru
      _
    // Predicated region
    $region6: #{tpu_custom_call.1} parent=1 // pred_check
      _
    $region7: #{tpu_custom_call.1} parent=1 // pred_check_branch
      %30 = sbr.rel (0) target = $region9
    $region8: #{tpu_custom_call.1} parent=1 // pred_region
      %32 = vsyncadd [#allocation7], 0
      %s33 = sshll.u32 %s1, 4
      %s34 = int_to_ptr.hbm [resolvable:$true] %s33
      %s35 = sshll.u32 [#allocation6], 4
      %s36 = int_to_ptr.vmem [resolvable:$true] %s35
      %41 = dma.hbm_to_vmem [thread:$0]  %s34, 2048, %s36, [#allocation7], 64, 64, 4
    $region9: #{tpu_custom_call.1} parent=1 // pred_fallthru
      _
    // Predicated region
    $region10: #{tpu_custom_call.1} parent=1 // pred_check
      _
    $region11: #{tpu_custom_call.1} parent=1 // pred_check_branch
      %43 = sbr.rel (0) target = $region13
    $region12: #{tpu_custom_call.1} parent=1 // pred_region
      _
    $region13: #{tpu_custom_call.1} parent=1 // pred_fallthru
      _
    // Predicated region
    $region14: #{tpu_custom_call.1} parent=1 // pred_check
      _
    $region15: #{tpu_custom_call.1} parent=1 // pred_check_branch
      %45 = sbr.rel (0) target = $region17
    $region16: #{tpu_custom_call.1} parent=1 // pred_region
      %47 = vsyncadd [#allocation7], 0
      %s48 = sshll.u32 %s3, 4
      %s49 = int_to_ptr.hbm [resolvable:$true] %s48
      %s50 = sshll.u32 [#allocation8], 4
      %s51 = int_to_ptr.vmem [resolvable:$true] %s50
      %56 = dma.hbm_to_vmem [thread:$0]  %s49, 1024, %s51, [#allocation7], 64, 64, 4
    $region17: #{tpu_custom_call.1} parent=1 // pred_fallthru
      _
    // Predicated region
    $region18: #{tpu_custom_call.1} parent=1 // pred_check
      _
    $region19: #{tpu_custom_call.1} parent=1 // pred_check_branch
      %58 = sbr.rel (0) target = $region21
    $region20: #{tpu_custom_call.1} parent=1 // pred_region
      _
    $region21: #{tpu_custom_call.1} parent=1 // pred_fallthru
      _
    // Predicated region
    $region22: #{tpu_custom_call.1} parent=1 // pred_check
      _
    $region23: #{tpu_custom_call.1} parent=1 // pred_check_branch
      %60 = sbr.rel (0) target = $region25
    $region24: #{tpu_custom_call.1} parent=1 // pred_region
      %62 = vsyncadd [#allocation10], 0
      %s63 = sshll.u32 %s5, 4
      %s64 = int_to_ptr.hbm [resolvable:$true] %s63
      %s65 = sshll.u32 [#allocation9], 4
      %s66 = int_to_ptr.vmem [resolvable:$true] %s65
      %71 = dma.hbm_to_vmem [thread:$0]  %s64, 1024, %s66, [#allocation10], 64, 64, 4
    $region25: #{tpu_custom_call.1} parent=1 // pred_fallthru
      _
    // Predicated region
    $region26: #{tpu_custom_call.1} parent=1 // pred_check
      _
    $region27: #{tpu_custom_call.1} parent=1 // pred_check_branch
      %73 = sbr.rel (0) target = $region29
    $region28: #{tpu_custom_call.1} parent=1 // pred_region
      _
    $region29: #{tpu_custom_call.1} parent=1 // pred_fallthru
      _
    // Predicated region
    $region30: #{tpu_custom_call.1} parent=1 // pred_check
      _
    $region31: #{tpu_custom_call.1} parent=1 // pred_check_branch
      %75 = sbr.rel (0) target = $region33
    $region32: #{tpu_custom_call.1} parent=1 // pred_region
      %77 = dma.done [#allocation4], 512
    $region33: #{tpu_custom_call.1} parent=1 // pred_fallthru
      _
    // Predicated region
    $region34: #{tpu_custom_call.1} parent=1 // pred_check
      _
    $region35: #{tpu_custom_call.1} parent=1 // pred_check_branch
      %79 = sbr.rel (0) target = $region37
    $region36: #{tpu_custom_call.1} parent=1 // pred_region
      %81 = dma.done [#allocation7], 2048
    $region37: #{tpu_custom_call.1} parent=1 // pred_fallthru
      _
    // Predicated region
    $region38: #{tpu_custom_call.1} parent=1 // pred_check
      _
    $region39: #{tpu_custom_call.1} parent=1 // pred_check_branch
      %83 = sbr.rel (0) target = $region41
    $region40: #{tpu_custom_call.1} parent=1 // pred_region
      %85 = dma.done [#allocation7], 1024
    $region41: #{tpu_custom_call.1} parent=1 // pred_fallthru
      _
    // Predicated region
    $region42: #{tpu_custom_call.1} parent=1 // pred_check
      _
    $region43: #{tpu_custom_call.1} parent=1 // pred_check_branch
      %87 = sbr.rel (0) target = $region45
    $region44: #{tpu_custom_call.1} parent=1 // pred_region
      %89 = dma.done [#allocation10], 1024
    $region45: #{tpu_custom_call.1} parent=1 // pred_fallthru
      _
    %p90 = scmp.eq.s32.totalorder 0, 0
    // Predicated region
    $region46: #{tpu_custom_call.1} parent=1 // pred_check
      %p91 = pneg %p90
    $region47: #{tpu_custom_call.1} parent=1 // pred_check_branch
      %93 = sbr.rel (%p91) target = $region49
    $region48: #{tpu_custom_call.1} parent=1 // pred_region
      %94 = vst [vmem:[#allocation2] sm:$0xff] 0.0
      %95 = vst [vmem:[#allocation2 + $0x8] sm:$0xff] 0.0
    $region49: #{tpu_custom_call.1} parent=1 // pred_fallthru
      _
    %v96 = vld [vmem:[#allocation2] sm:$0xff]
    %v97 = vld [vmem:[#allocation2 + $0x8] sm:$0xff]
    %v98 = vld [vmem:[#allocation3] sm:$0xff]
    %v99 = vld [vmem:[#allocation3 + $0x8] sm:$0xff]
    %v100 = vld [vmem:[#allocation3 + $0x10] sm:$0xff]
    %v101 = vld [vmem:[#allocation3 + $0x18] sm:$0xff]
    %v102 = vpack.c.bf16 %v100, %v98
    %v103 = vpack.c.bf16 %v101, %v99
    %v104 = vld [vmem:[#allocation6] sm:$0xf]
    %v105 = vld [vmem:[#allocation6 + $0x4] sm:$0xf]
    %v106 = vld [vmem:[#allocation6 + $0x8] sm:$0xf]
    %v107 = vld [vmem:[#allocation6 + $0xc] sm:$0xf]
    %v108 = vld [vmem:[#allocation6 + $0x10] sm:$0xf]
    %v109 = vld [vmem:[#allocation6 + $0x14] sm:$0xf]
    %v110 = vld [vmem:[#allocation6 + $0x18] sm:$0xf]
    %v111 = vld [vmem:[#allocation6 + $0x1c] sm:$0xf]
    %v112 = vld [vmem:[#allocation6 + $0x20] sm:$0xf]
    %v113 = vld [vmem:[#allocation6 + $0x24] sm:$0xf]
    %v114 = vld [vmem:[#allocation6 + $0x28] sm:$0xf]
    %v115 = vld [vmem:[#allocation6 + $0x2c] sm:$0xf]
    %v116 = vld [vmem:[#allocation6 + $0x30] sm:$0xf]
    %v117 = vld [vmem:[#allocation6 + $0x34] sm:$0xf]
    %v118 = vld [vmem:[#allocation6 + $0x38] sm:$0xf]
    %v119 = vld [vmem:[#allocation6 + $0x3c] sm:$0xf]
    %v120 = vld [vmem:[#allocation6 + $0x40] sm:$0xf]
    %v121 = vld [vmem:[#allocation6 + $0x44] sm:$0xf]
    %v122 = vld [vmem:[#allocation6 + $0x48] sm:$0xf]
    %v123 = vld [vmem:[#allocation6 + $0x4c] sm:$0xf]
    %v124 = vld [vmem:[#allocation6 + $0x50] sm:$0xf]
    %v125 = vld [vmem:[#allocation6 + $0x54] sm:$0xf]
    %v126 = vld [vmem:[#allocation6 + $0x58] sm:$0xf]
    %v127 = vld [vmem:[#allocation6 + $0x5c] sm:$0xf]
    %v128 = vld [vmem:[#allocation6 + $0x60] sm:$0xf]
    %v129 = vld [vmem:[#allocation6 + $0x64] sm:$0xf]
    %v130 = vld [vmem:[#allocation6 + $0x68] sm:$0xf]
    %v131 = vld [vmem:[#allocation6 + $0x6c] sm:$0xf]
    %v132 = vld [vmem:[#allocation6 + $0x70] sm:$0xf]
    %v133 = vld [vmem:[#allocation6 + $0x74] sm:$0xf]
    %v134 = vld [vmem:[#allocation6 + $0x78] sm:$0xf]
    %v135 = vld [vmem:[#allocation6 + $0x7c] sm:$0xf]
    %v168 = vunpack.c.l.b16 %v104
    %v169 = vunpack.c.l.b16 %v105
    %v170 = vunpack.c.l.b16 %v106
    %v171 = vunpack.c.l.b16 %v107
    %v172 = vunpack.c.l.b16 %v108
    %v173 = vunpack.c.l.b16 %v109
    %v174 = vunpack.c.l.b16 %v110
    %v175 = vunpack.c.l.b16 %v111
    %v176 = vunpack.c.l.b16 %v112
    %v177 = vunpack.c.l.b16 %v113
    %v178 = vunpack.c.l.b16 %v114
    %v179 = vunpack.c.l.b16 %v115
    %v180 = vunpack.c.l.b16 %v116
    %v181 = vunpack.c.l.b16 %v117
    %v182 = vunpack.c.l.b16 %v118
    %v183 = vunpack.c.l.b16 %v119
    %v184 = vunpack.c.l.b16 %v120
    %v185 = vunpack.c.l.b16 %v121
    %v186 = vunpack.c.l.b16 %v122
    %v187 = vunpack.c.l.b16 %v123
    %v188 = vunpack.c.l.b16 %v124
    %v189 = vunpack.c.l.b16 %v125
    %v190 = vunpack.c.l.b16 %v126
    %v191 = vunpack.c.l.b16 %v127
    %v192 = vunpack.c.l.b16 %v128
    %v193 = vunpack.c.l.b16 %v129
    %v194 = vunpack.c.l.b16 %v130
    %v195 = vunpack.c.l.b16 %v131
    %v196 = vunpack.c.l.b16 %v132
    %v197 = vunpack.c.l.b16 %v133
    %v198 = vunpack.c.l.b16 %v134
    %v199 = vunpack.c.l.b16 %v135
    %v200 = vpack.c.b16 %v169, %v168
    %v201 = vpack.c.b16 %v171, %v170
    %v202 = vpack.c.b16 %v173, %v172
    %v203 = vpack.c.b16 %v175, %v174
    %v204 = vpack.c.b16 %v177, %v176
    %v205 = vpack.c.b16 %v179, %v178
    %v206 = vpack.c.b16 %v181, %v180
    %v207 = vpack.c.b16 %v183, %v182
    %v208 = vpack.c.b16 %v185, %v184
    %v209 = vpack.c.b16 %v187, %v186
    %v210 = vpack.c.b16 %v189, %v188
    %v211 = vpack.c.b16 %v191, %v190
    %v212 = vpack.c.b16 %v193, %v192
    %v213 = vpack.c.b16 %v195, %v194
    %v214 = vpack.c.b16 %v197, %v196
    %v215 = vpack.c.b16 %v199, %v198
    %232 = vmatpush.bf16.msra.mxu0 %v207
    %233 = vmatpush.bf16.msra.mxu0 %v206
    %234 = vmatpush.bf16.msra.mxu0 %v205
    %235 = vmatpush.bf16.msra.mxu0 %v204
    %236 = vmatpush.bf16.msra.mxu0 %v203
    %237 = vmatpush.bf16.msra.mxu0 %v202
    %238 = vmatpush.bf16.msra.mxu0 %v201
    %239 = vmatpush.bf16.msra.mxu0 %v200
    %240 = vmatmul.bf16.gmra.mxu0 %v102
    %v241 = vpop.f32.mrf.mxu0
    %v242 = vadd.f32 0.0, %v241
    %v243 = vpop.f32.mrf.mxu0
    %v244 = vadd.f32 0.0, %v243
    %245 = vdwg.mxu0
    %246 = vmatpush.bf16.msra.mxu0 %v215
    %247 = vmatpush.bf16.msra.mxu0 %v214
    %248 = vmatpush.bf16.msra.mxu0 %v213
    %249 = vmatpush.bf16.msra.mxu0 %v212
    %250 = vmatpush.bf16.msra.mxu0 %v211
    %251 = vmatpush.bf16.msra.mxu0 %v210
    %252 = vmatpush.bf16.msra.mxu0 %v209
    %253 = vmatpush.bf16.msra.mxu0 %v208
    %254 = vmatmul.bf16.gmra.mxu0 %v103
    %v255 = vpop.f32.mrf.mxu0
    %v256 = vadd.f32 %v242, %v255
    %v257 = vpop.f32.mrf.mxu0
    %v258 = vadd.f32 %v244, %v257
    %259 = vdwg.mxu0
    %v260 = vadd.f32 %v96, %v256
    %v261 = vadd.f32 %v97, %v258
    %262 = vst [vmem:[#allocation2] sm:$0xff] %v260
    %263 = vst [vmem:[#allocation2 + $0x8] sm:$0xff] %v261
    // Predicated region
    $region50: #{tpu_custom_call.1} parent=1 // pred_check
      %p264 = pneg %p90
    $region51: #{tpu_custom_call.1} parent=1 // pred_check_branch
      %266 = sbr.rel (%p264) target = $region53
    $region52: #{tpu_custom_call.1} parent=1 // pred_region
      %v267 = vld [vmem:[#allocation2] sm:$0xff]
      %v268 = vld [vmem:[#allocation2 + $0x8] sm:$0xff]
      %v269 = vld [vmem:[%s2] sm:$0x1]
      %v271 = vperm.slane %v269, 0
      %v273 = vadd.f32 %v267, %v271
      %v274 = vadd.f32 %v268, %v271
      %v275 = vmax.f32 %v273, 0.0
      %v276 = vmax.f32 %v274, 0.0
      %v277 = vpack.c.bf16 %v276, %v275
      %v278 = vld [vmem:[#allocation8] sm:$0xf]
      %v279 = vld [vmem:[#allocation8 + $0x4] sm:$0xf]
      %v280 = vld [vmem:[#allocation8 + $0x8] sm:$0xf]
      %v281 = vld [vmem:[#allocation8 + $0xc] sm:$0xf]
      %v282 = vld [vmem:[#allocation8 + $0x10] sm:$0xf]
      %v283 = vld [vmem:[#allocation8 + $0x14] sm:$0xf]
      %v284 = vld [vmem:[#allocation8 + $0x18] sm:$0xf]
      %v285 = vld [vmem:[#allocation8 + $0x1c] sm:$0xf]
      %v286 = vld [vmem:[#allocation8 + $0x20] sm:$0xf]
      %v287 = vld [vmem:[#allocation8 + $0x24] sm:$0xf]
      %v288 = vld [vmem:[#allocation8 + $0x28] sm:$0xf]
      %v289 = vld [vmem:[#allocation8 + $0x2c] sm:$0xf]
      %v290 = vld [vmem:[#allocation8 + $0x30] sm:$0xf]
      %v291 = vld [vmem:[#allocation8 + $0x34] sm:$0xf]
      %v292 = vld [vmem:[#allocation8 + $0x38] sm:$0xf]
      %v293 = vld [vmem:[#allocation8 + $0x3c] sm:$0xf]
      %v294 = vld [vmem:[%s4] sm:$0x1]
      %v296 = vperm.slane %v294, 0
      %v314 = vunpack.c.l.b16 %v278
      %v315 = vunpack.c.l.b16 %v279
      %v316 = vunpack.c.l.b16 %v280
      %v317 = vunpack.c.l.b16 %v281
      %v318 = vunpack.c.l.b16 %v282
      %v319 = vunpack.c.l.b16 %v283
      %v320 = vunpack.c.l.b16 %v284
      %v321 = vunpack.c.l.b16 %v285
      %v322 = vunpack.c.l.b16 %v286
      %v323 = vunpack.c.l.b16 %v287
      %v324 = vunpack.c.l.b16 %v288
      %v325 = vunpack.c.l.b16 %v289
      %v326 = vunpack.c.l.b16 %v290
      %v327 = vunpack.c.l.b16 %v291
      %v328 = vunpack.c.l.b16 %v292
      %v329 = vunpack.c.l.b16 %v293
      %v330 = vpack.c.b16 %v315, %v314
      %v331 = vpack.c.b16 %v317, %v316
      %v332 = vpack.c.b16 %v319, %v318
      %v333 = vpack.c.b16 %v321, %v320
      %v334 = vpack.c.b16 %v323, %v322
      %v335 = vpack.c.b16 %v325, %v324
      %v336 = vpack.c.b16 %v327, %v326
      %v337 = vpack.c.b16 %v329, %v328
      %346 = vmatpush.bf16.msra.mxu0 %v337
      %347 = vmatpush.bf16.msra.mxu0 %v336
      %348 = vmatpush.bf16.msra.mxu0 %v335
      %349 = vmatpush.bf16.msra.mxu0 %v334
      %350 = vmatpush.bf16.msra.mxu0 %v333
      %351 = vmatpush.bf16.msra.mxu0 %v332
      %352 = vmatpush.bf16.msra.mxu0 %v331
      %353 = vmatpush.bf16.msra.mxu0 %v330
      %354 = vmatmul.bf16.gmra.mxu0 %v277
      %v355 = vpop.f32.mrf.mxu0
      %v356 = vadd.f32 %v296, %v355
      %v357 = vpop.f32.mrf.mxu0
      %v358 = vadd.f32 %v296, %v357
      %359 = vdwg.mxu0
      %v360 = vmax.f32 %v356, 0.0
      %v361 = vmax.f32 %v358, 0.0
      %v362 = vpack.c.bf16 %v361, %v360
      %v363 = vld [vmem:[#allocation9] sm:$0xf]
      %v364 = vld [vmem:[#allocation9 + $0x4] sm:$0xf]
      %v365 = vld [vmem:[#allocation9 + $0x8] sm:$0xf]
      %v366 = vld [vmem:[#allocation9 + $0xc] sm:$0xf]
      %v367 = vld [vmem:[#allocation9 + $0x10] sm:$0xf]
      %v368 = vld [vmem:[#allocation9 + $0x14] sm:$0xf]
      %v369 = vld [vmem:[#allocation9 + $0x18] sm:$0xf]
      %v370 = vld [vmem:[#allocation9 + $0x1c] sm:$0xf]
      %v371 = vld [vmem:[#allocation9 + $0x20] sm:$0xf]
      %v372 = vld [vmem:[#allocation9 + $0x24] sm:$0xf]
      %v373 = vld [vmem:[#allocation9 + $0x28] sm:$0xf]
      %v374 = vld [vmem:[#allocation9 + $0x2c] sm:$0xf]
      %v375 = vld [vmem:[#allocation9 + $0x30] sm:$0xf]
      %v376 = vld [vmem:[#allocation9 + $0x34] sm:$0xf]
      %v377 = vld [vmem:[#allocation9 + $0x38] sm:$0xf]
      %v378 = vld [vmem:[#allocation9 + $0x3c] sm:$0xf]
      %v379 = vld [vmem:[%s6] sm:$0x1]
      %v381 = vperm.slane %v379, 0
      %v399 = vunpack.c.l.b16 %v363
      %v400 = vunpack.c.l.b16 %v364
      %v401 = vunpack.c.l.b16 %v365
      %v402 = vunpack.c.l.b16 %v366
      %v403 = vunpack.c.l.b16 %v367
      %v404 = vunpack.c.l.b16 %v368
      %v405 = vunpack.c.l.b16 %v369
      %v406 = vunpack.c.l.b16 %v370
      %v407 = vunpack.c.l.b16 %v371
      %v408 = vunpack.c.l.b16 %v372
      %v409 = vunpack.c.l.b16 %v373
      %v410 = vunpack.c.l.b16 %v374
      %v411 = vunpack.c.l.b16 %v375
      %v412 = vunpack.c.l.b16 %v376
      %v413 = vunpack.c.l.b16 %v377
      %v414 = vunpack.c.l.b16 %v378
      %v415 = vpack.c.b16 %v400, %v399
      %v416 = vpack.c.b16 %v402, %v401
      %v417 = vpack.c.b16 %v404, %v403
      %v418 = vpack.c.b16 %v406, %v405
      %v419 = vpack.c.b16 %v408, %v407
      %v420 = vpack.c.b16 %v410, %v409
      %v421 = vpack.c.b16 %v412, %v411
      %v422 = vpack.c.b16 %v414, %v413
      %431 = vmatpush.bf16.msra.mxu0 %v422
      %432 = vmatpush.bf16.msra.mxu0 %v421
      %433 = vmatpush.bf16.msra.mxu0 %v420
      %434 = vmatpush.bf16.msra.mxu0 %v419
      %435 = vmatpush.bf16.msra.mxu0 %v418
      %436 = vmatpush.bf16.msra.mxu0 %v417
      %437 = vmatpush.bf16.msra.mxu0 %v416
      %438 = vmatpush.bf16.msra.mxu0 %v415
      %439 = vmatmul.bf16.gmra.mxu0 %v362
      %v440 = vpop.f32.mrf.mxu0
      %v441 = vadd.f32 %v381, %v440
      %v442 = vpop.f32.mrf.mxu0
      %v443 = vadd.f32 %v381, %v442
      %444 = vdwg.mxu0
      %445 = vmax.xlane.f32.xlu0 %v441
      %v446 = vpop.xlane.xlu0 %445
      %447 = vmax.xlane.f32.xlu0 %v443
      %v448 = vpop.xlane.xlu0 %447
      %v449 = vsub.f32 %v441, %v446
      %v450 = vsub.f32 %v443, %v448
      %v451 = vmul.f32 %v449, 1.442695
      %v452 = vpow.pop %v451
      %v453 = vmul.f32 %v450, 1.442695
      %v454 = vpow.pop %v453
      %455 = vadd.xlane.f32.xlu0 %v452
      %v456 = vpop.xlane.xlu0 %455
      %457 = vadd.xlane.f32.xlu0 %v454
      %v458 = vpop.xlane.xlu0 %457
      %v459 = vrcp.pop %v456
      %v460 = vrcp.pop %v458
      %v461 = vmul.f32 %v452, %v459
      %v462 = vmul.f32 %v454, %v460
      %463 = vst [vmem:[#allocation11] sm:$0xff] %v461
      %464 = vst [vmem:[#allocation11 + $0x8] sm:$0xff] %v462
    $region53: #{tpu_custom_call.1} parent=1 // pred_fallthru
      _
    // Predicated region
    $region54: #{tpu_custom_call.1} parent=1 // pred_check
      _
    $region55: #{tpu_custom_call.1} parent=1 // pred_check_branch
      %466 = sbr.rel (0) target = $region57
    $region56: #{tpu_custom_call.1} parent=1 // pred_region
      %468 = vsyncadd [#allocation5], 0
      %s469 = sshll.u32 [#allocation11], 4
      %s470 = int_to_ptr.vmem [resolvable:$true] %s469
      %s471 = sshll.u32 %s7, 4
      %s472 = int_to_ptr.hbm [resolvable:$true] %s471
      %477 = dma.vmem_to_hbm [thread:$0]  %s470, 256, %s472, [#allocation5], 128, 128, 8
    $region57: #{tpu_custom_call.1} parent=1 // pred_fallthru
      _
    // Predicated region
    $region58: #{tpu_custom_call.1} parent=1 // pred_check
      _
    $region59: #{tpu_custom_call.1} parent=1 // pred_check_branch
      %479 = sbr.rel (0) target = $region61
    $region60: #{tpu_custom_call.1} parent=1 // pred_region
      %481 = dma.done [#allocation5], 256
    $region61: #{tpu_custom_call.1} parent=1 // pred_fallthru
      _
    %482 = vsyncpa [#allocation4], 1
    %483 = vsyncpa [#allocation7], 1
    %484 = vsyncpa [#allocation10], 1
    %485 = vsyncpa [#allocation5], 1

</llo_original>
